<compile_context>
chip_gen: v7x
topology: tpu7x:2x2x1
jax: 0.10.0
libtpu: 0.0.40
codegen_flags: <defaults>
</compile_context>

<pallas_src>
import jax
import jax.numpy as jnp
from jax import lax
from jax.experimental import pallas as pl
from jax.experimental.pallas import tpu as pltpu


def _pick_block_batch(B, L, target_rows=2048):
    """Largest divisor BB of B with a lane-aligned block (BB*L % 128 == 0) and
    BB*L <= target_rows, preferring >= 4 grid steps (>= 2 per v7x TC)."""
    divs = [d for d in range(1, B + 1) if B % d == 0]
    cands = [d for d in divs if (d * L) % 128 == 0 and d * L <= target_rows]
    if not cands:
        return B  # single full-array block (small / unaligned problem)
    pref = [d for d in cands if B // d >= 4]
    return max(pref) if pref else max(cands)


def _vmem_limit_bytes(BB, L, ni, nf, ks):
    """Padded-tile VMEM estimate, clamped to 75% of physical VMEM."""
    def rup(v, m):
        return ((v + m - 1) // m) * m

    n_pad = rup(BB * L, 128)
    c_pad = rup(max(ni, nf), 8)
    slab = c_pad * n_pad * 4                     # one padded (C, BB*L) f32 slab
    io = 2 * 2 * slab                            # double-buffered in + out blocks
    wts = 2 * ks * (rup(nf, 8) * rup(ni, 128) +
                    rup(ni, 8) * rup(nf, 128)) * 4
    small = 2 * 4 * rup(max(ni, nf), 8) * 128 * 4    # biases / gamma / beta tiles
    work = 12 * slab                             # live activation slabs + headroom
    need = io + wts + small + work

    cap = 64 << 20                               # conservative default (v7x)
    try:
        info = pltpu.get_tpu_info()
        cap = getattr(info, "vmem_capacity_bytes", cap) or cap
    except Exception:
        pass
    return int(min(int(0.75 * cap), max(32 << 20, 2 * need)))


def _make_kernel(BB, L, ni, nf, ks, pad, eps, use_bf16):
    NTOT = BB * L
    lane_aligned = (NTOT % 128 == 0)

    def _rot(v, d):
        """y[:, j] = v[:, (j + d) % NTOT] for a static (possibly negative) d."""
        dd = d % NTOT
        if dd == 0:
            return v
        if lane_aligned:
            # XLU lane rotation; jnp.roll semantics => shift = -dd mod NTOT.
            return pltpu.roll(v, shift=NTOT - dd, axis=1)
        # Unaligned tiny block (grid == 1): two-slice rotate.
        return jnp.concatenate([v[:, dd:], v[:, :dd]], axis=1)

    def kernel(x_ref, w1_ref, b1_ref, w2_ref, b2_ref, g_ref, bt_ref, out_ref):
        x = x_ref[...]                                         # (ni, BB*L)

        # Hoisted once: position-within-sequence, for boundary masking of taps.
        t_idx = lax.broadcasted_iota(jnp.int32, (1, NTOT), 1) % L

        def taps(v):
            """taps[k][:, b*L + t] = v[:, b*L + t + (k - pad)], zero outside [0, L)."""
            outs = []
            for k in range(ks):
                d = k - pad
                vk = _rot(v, d)
                if d > 0:
                    vk = jnp.where(t_idx < (L - d), vk, 0.0)
                elif d < 0:
                    vk = jnp.where(t_idx >= (-d), vk, 0.0)
                outs.append(vk)
            return outs

        def conv_relu(v_taps, w_ref, bias):
            acc = None
            for k in range(ks):
                wk = w_ref[k]                                  # (Cout, Cin)
                vk = v_taps[k]                                 # (Cin, BB*L)
                if use_bf16:
                    wk = wk.astype(jnp.bfloat16)
                    vk = vk.astype(jnp.bfloat16)
                part = jnp.dot(wk, vk, preferred_element_type=jnp.float32)
                acc = part if acc is None else acc + part
            return jnp.maximum(acc + bias, 0.0)                # (Cout, BB*L)

        h = conv_relu(taps(x), w1_ref, b1_ref[...])            # (nf, BB*L)
        y = conv_relu(taps(h), w2_ref, b2_ref[...])            # (ni, BB*L)

        # TODO(synk): dropout is identity in eval mode; training-mode dropout
        # (pltpu.prng_random_bits mask) not implemented.

        # Residual + LayerNorm over the channel (sublane) axis.
        z = y + x
        mean = jnp.mean(z, axis=0, keepdims=True)              # (1, BB*L)
        zc = z - mean
        var = jnp.mean(zc * zc, axis=0, keepdims=True)
        zn = zc * lax.rsqrt(var + eps)
        out_ref[...] = zn * g_ref[...] + bt_ref[...]

    return kernel


def res_conv_forward(x, w1, b1, w2, b2, gamma, beta, *, ks, eps=1e-5,
                     block_batch=None, use_bf16_matmul=False):
    """x: (B, L, ni) f32.  w1: (nf, ni, ks), w2: (ni, nf, ks) [PyTorch layout]."""
    B, L, ni = x.shape
    nf = w1.shape[0]
    assert ks % 2 == 1, "ResConv kernel requires odd kernel_size ('same' padding)"
    pad = (ks - 1) // 2

    BB = block_batch if block_batch is not None else _pick_block_batch(B, L)
    assert B % BB == 0, "block_batch must divide B"
    NTOT = BB * L
    assert (NTOT % 128 == 0) or (BB == B), \
        "block lane extent must be 128-aligned or cover the full array"
    nb = B // BB

    # Lane-dense layout: channels on sublanes, flattened (batch, time) on lanes.
    xt = jnp.transpose(x.astype(jnp.float32), (2, 0, 1)).reshape(ni, B * L)

    # Per-tap weight matrices, tap-major: (ks, Cout, Cin).
    w_dtype = jnp.bfloat16 if use_bf16_matmul else jnp.float32
    w1_r = jnp.transpose(w1, (2, 0, 1)).astype(w_dtype)        # (ks, nf, ni)
    w2_r = jnp.transpose(w2, (2, 0, 1)).astype(w_dtype)        # (ks, ni, nf)
    b1_r = b1.reshape(nf, 1).astype(jnp.float32)
    b2_r = b2.reshape(ni, 1).astype(jnp.float32)
    g_r = gamma.reshape(ni, 1).astype(jnp.float32)
    bt_r = beta.reshape(ni, 1).astype(jnp.float32)

    kernel = _make_kernel(BB, L, ni, nf, ks, pad, eps, use_bf16_matmul)
    vmem_limit = _vmem_limit_bytes(BB, L, ni, nf, ks)

    out_t = pl.pallas_call(
        kernel,
        out_shape=jax.ShapeDtypeStruct((ni, B * L), jnp.float32),
        grid_spec=pltpu.PrefetchScalarGridSpec(
            num_scalar_prefetch=0,
            grid=(nb,),
            in_specs=[
                pl.BlockSpec((ni, NTOT), lambda b: (0, b)),        # x (lane-dense)
                pl.BlockSpec((ks, nf, ni), lambda b: (0, 0, 0)),   # conv1 W taps
                pl.BlockSpec((nf, 1), lambda b: (0, 0)),           # conv1 bias
                pl.BlockSpec((ks, ni, nf), lambda b: (0, 0, 0)),   # conv2 W taps
                pl.BlockSpec((ni, 1), lambda b: (0, 0)),           # conv2 bias
                pl.BlockSpec((ni, 1), lambda b: (0, 0)),           # ln gamma
                pl.BlockSpec((ni, 1), lambda b: (0, 0)),           # ln beta
            ],
            out_specs=pl.BlockSpec((ni, NTOT), lambda b: (0, b)),  # lane-dense out
        ),
        compiler_params=pltpu.CompilerParams(
            dimension_semantics=("parallel",),
            vmem_limit_bytes=vmem_limit),
    )(xt, w1_r, b1_r, w2_r, b2_r, g_r, bt_r)

    return jnp.transpose(out_t.reshape(ni, B, L), (1, 2, 0))       # (B, L, ni)


def res_conv_reference(x, w1, b1, w2, b2, gamma, beta, *, ks, eps=1e-5):
    """Pure-JAX reference mirroring the PyTorch forward (eval mode)."""
    pad = (ks - 1) // 2
    xc = jnp.transpose(x, (0, 2, 1))  # (B, ni, L) == inp.transpose(1, 2)
    dn = ('NCH', 'OIH', 'NCH')
    h = lax.conv_general_dilated(xc, w1, window_strides=(1,),
                                 padding=[(pad, pad)], dimension_numbers=dn)
    h = jax.nn.relu(h + b1[None, :, None])
    y = lax.conv_general_dilated(h, w2, window_strides=(1,),
                                 padding=[(pad, pad)], dimension_numbers=dn)
    y = jax.nn.relu(y + b2[None, :, None])
    z = jnp.transpose(y, (0, 2, 1)) + x
    mean = jnp.mean(z, axis=-1, keepdims=True)
    var = jnp.mean((z - mean) ** 2, axis=-1, keepdims=True)
    return (z - mean) * lax.rsqrt(var + eps) * gamma + beta


if __name__ == "__main__":
    # module hyperparameters: ResConv(ni=4, ks=3, nf=8, p=0.1)
    ni, ks, nf, p = 4, 3, 8, 0.1
    # B*L = 512 so blocks are lane-aligned (BB=4 -> 128 lanes) with a 4-step
    # "parallel" grid (>= 2 steps per v7x TensorCore).
    B, L = 16, 32

    key = jax.random.PRNGKey(0)
    kx, k1, k2, k3, k4 = jax.random.split(key, 5)

    # deterministic parameter init (PyTorch-style uniform bounds)
    bound1 = 1.0 / (ni * ks) ** 0.5
    bound2 = 1.0 / (nf * ks) ** 0.5
    w1 = jax.random.uniform(k1, (nf, ni, ks), jnp.float32, -bound1, bound1)
    b1 = jax.random.uniform(k2, (nf,), jnp.float32, -bound1, bound1)
    w2 = jax.random.uniform(k3, (ni, nf, ks), jnp.float32, -bound2, bound2)
    b2 = jax.random.uniform(k4, (ni,), jnp.float32, -bound2, bound2)
    gamma = jnp.ones((ni,), jnp.float32)
    beta = jnp.zeros((ni,), jnp.float32)

    x = jax.random.normal(kx, (B, L, ni), jnp.float32)

    out = res_conv_forward(x, w1, b1, w2, b2, gamma, beta, ks=ks)
    out = jax.block_until_ready(out)

    ref = res_conv_reference(x, w1, b1, w2, b2, gamma, beta, ks=ks)
    assert out.shape == (B, L, ni)
    assert jnp.allclose(out, ref, atol=1e-5, rtol=1e-5), "mismatch vs reference"

    print("KERNEL_OK")
</pallas_src>

<mosaic_0001>
module attributes {stable_mosaic.version = 11 : i64} {
  func.func @kernel(%arg0: i32, %arg1: memref<4x128xf32, #tpu.memory_space<vmem>>, %arg2: memref<3x8x4xf32, #tpu.memory_space<vmem>>, %arg3: memref<8x1xf32, #tpu.memory_space<vmem>>, %arg4: memref<3x4x8xf32, #tpu.memory_space<vmem>>, %arg5: memref<4x1xf32, #tpu.memory_space<vmem>>, %arg6: memref<4x1xf32, #tpu.memory_space<vmem>>, %arg7: memref<4x1xf32, #tpu.memory_space<vmem>>, %arg8: memref<4x128xf32, #tpu.memory_space<vmem>>) attributes {dimension_semantics = [#tpu.dimension_semantics<parallel>], iteration_bounds = array<i64: 4>, scalar_prefetch = 0 : i64, scratch_operands = 0 : i64, tpu.core_type = #tpu.core_type<tc>, window_params = [{transform_indices = @transform_0, window_bounds = array<i64: 4, 128>}, {pipeline_mode = #tpu.pipeline_mode<synchronous>, transform_indices = @transform_1, window_bounds = array<i64: 3, 8, 4>}, {pipeline_mode = #tpu.pipeline_mode<synchronous>, transform_indices = @transform_2, window_bounds = array<i64: 8, 1>}, {pipeline_mode = #tpu.pipeline_mode<synchronous>, transform_indices = @transform_3, window_bounds = array<i64: 3, 4, 8>}, {pipeline_mode = #tpu.pipeline_mode<synchronous>, transform_indices = @transform_4, window_bounds = array<i64: 4, 1>}, {pipeline_mode = #tpu.pipeline_mode<synchronous>, transform_indices = @transform_5, window_bounds = array<i64: 4, 1>}, {pipeline_mode = #tpu.pipeline_mode<synchronous>, transform_indices = @transform_6, window_bounds = array<i64: 4, 1>}, {transform_indices = @transform_7, window_bounds = array<i64: 4, 128>}]} {
    %c0 = arith.constant 0 : index
    %c0_0 = arith.constant 0 : index
    %0 = vector.load %arg1[%c0, %c0_0] : memref<4x128xf32, #tpu.memory_space<vmem>>, vector<4x128xf32>
    %1 = tpu.iota {dimensions = array<i32: 1>} : vector<1x128xi32>
    %c32_i32 = arith.constant 32 : i32
    %c0_i32 = arith.constant 0 : i32
    %2 = arith.cmpi eq, %c32_i32, %c0_i32 : i32
    %c1_i32 = arith.constant 1 : i32
    %3 = arith.select %2, %c1_i32, %c32_i32 : i32
    %4 = vector.broadcast %3 : i32 to vector<1x128xi32>
    %5 = arith.remsi %1, %4 : vector<1x128xi32>
    %c0_i32_1 = arith.constant 0 : i32
    %6 = vector.broadcast %c0_i32_1 : i32 to vector<1x128xi32>
    %7 = arith.cmpi ne, %5, %6 : vector<1x128xi32>
    %c0_i32_2 = arith.constant 0 : i32
    %8 = vector.broadcast %c0_i32_2 : i32 to vector<1x128xi32>
    %9 = arith.cmpi slt, %5, %8 : vector<1x128xi32>
    %c0_i32_3 = arith.constant 0 : i32
    %10 = arith.cmpi slt, %3, %c0_i32_3 : i32
    %11 = vector.broadcast %10 : i1 to vector<1x128xi1>
    %12 = vector.broadcast %11 : vector<1x128xi1> to vector<1x128xi1>
    %13 = arith.xori %9, %12 : vector<1x128xi1>
    %14 = arith.andi %13, %7 : vector<1x128xi1>
    %15 = vector.broadcast %3 : i32 to vector<1x128xi32>
    %16 = arith.addi %5, %15 : vector<1x128xi32>
    %17 = arith.select %14, %16, %5 : vector<1x128xi1>, vector<1x128xi32>
    %c1_i32_4 = arith.constant 1 : i32
    %18 = tpu.dynamic_rotate %0 by %c1_i32_4 dim 1 : vector<4x128xf32>, i32 -> vector<4x128xf32>
    %c1_i32_5 = arith.constant 1 : i32
    %19 = vector.broadcast %c1_i32_5 : i32 to vector<1x128xi32>
    %20 = arith.cmpi sge, %17, %19 : vector<1x128xi32>
    %cst = arith.constant 0.000000e+00 : f32
    %21 = vector.shape_cast %20 : vector<1x128xi1> to vector<1x128xi1>
    %22 = vector.broadcast %21 : vector<1x128xi1> to vector<4x128xi1>
    %23 = vector.broadcast %cst : f32 to vector<4x128xf32>
    %24 = arith.select %22, %18, %23 : vector<4x128xi1>, vector<4x128xf32>
    %c127_i32 = arith.constant 127 : i32
    %25 = tpu.dynamic_rotate %0 by %c127_i32 dim 1 : vector<4x128xf32>, i32 -> vector<4x128xf32>
    %c31_i32 = arith.constant 31 : i32
    %26 = vector.broadcast %c31_i32 : i32 to vector<1x128xi32>
    %27 = arith.cmpi slt, %17, %26 : vector<1x128xi32>
    %cst_6 = arith.constant 0.000000e+00 : f32
    %28 = vector.shape_cast %27 : vector<1x128xi1> to vector<1x128xi1>
    %29 = vector.broadcast %28 : vector<1x128xi1> to vector<4x128xi1>
    %30 = vector.broadcast %cst_6 : f32 to vector<4x128xf32>
    %31 = arith.select %29, %25, %30 : vector<4x128xi1>, vector<4x128xf32>
    %c0_7 = arith.constant 0 : index
    %c0_8 = arith.constant 0 : index
    %32 = vector.load %arg3[%c0_7, %c0_8] : memref<8x1xf32, #tpu.memory_space<vmem>>, vector<8x1xf32>
    %c0_9 = arith.constant 0 : index
    %c0_10 = arith.constant 0 : index
    %c0_11 = arith.constant 0 : index
    %33 = vector.load %arg2[%c0_9, %c0_10, %c0_11] : memref<3x8x4xf32, #tpu.memory_space<vmem>>, vector<1x8x4xf32>
    %34 = vector.shape_cast %33 : vector<1x8x4xf32> to vector<8x4xf32>
    %cst_12 = arith.constant dense<0.000000e+00> : vector<8x128xf32>
    %35 = tpu.matmul %34, %24, %cst_12 {dimension_numbers = #tpu.dot_dimension_numbers<[1], [0], [0], [1], [0, 0, 1, 1], [], []>} : vector<8x4xf32>, vector<4x128xf32>, vector<8x128xf32> -> vector<8x128xf32>
    %c1 = arith.constant 1 : index
    %c0_13 = arith.constant 0 : index
    %c0_14 = arith.constant 0 : index
    %36 = vector.load %arg2[%c1, %c0_13, %c0_14] : memref<3x8x4xf32, #tpu.memory_space<vmem>>, vector<1x8x4xf32>
    %37 = vector.shape_cast %36 : vector<1x8x4xf32> to vector<8x4xf32>
    %cst_15 = arith.constant dense<0.000000e+00> : vector<8x128xf32>
    %38 = tpu.matmul %37, %0, %cst_15 {dimension_numbers = #tpu.dot_dimension_numbers<[1], [0], [0], [1], [0, 0, 1, 1], [], []>} : vector<8x4xf32>, vector<4x128xf32>, vector<8x128xf32> -> vector<8x128xf32>
    %39 = arith.addf %35, %38 : vector<8x128xf32>
    %c2 = arith.constant 2 : index
    %c0_16 = arith.constant 0 : index
    %c0_17 = arith.constant 0 : index
    %40 = vector.load %arg2[%c2, %c0_16, %c0_17] : memref<3x8x4xf32, #tpu.memory_space<vmem>>, vector<1x8x4xf32>
    %41 = vector.shape_cast %40 : vector<1x8x4xf32> to vector<8x4xf32>
    %cst_18 = arith.constant dense<0.000000e+00> : vector<8x128xf32>
    %42 = tpu.matmul %41, %31, %cst_18 {dimension_numbers = #tpu.dot_dimension_numbers<[1], [0], [0], [1], [0, 0, 1, 1], [], []>} : vector<8x4xf32>, vector<4x128xf32>, vector<8x128xf32> -> vector<8x128xf32>
    %43 = arith.addf %39, %42 : vector<8x128xf32>
    %44 = vector.broadcast %32 : vector<8x1xf32> to vector<8x128xf32>
    %45 = arith.addf %43, %44 : vector<8x128xf32>
    %cst_19 = arith.constant 0.000000e+00 : f32
    %46 = vector.broadcast %cst_19 : f32 to vector<8x128xf32>
    %47 = arith.maximumf %45, %46 : vector<8x128xf32>
    %c1_i32_20 = arith.constant 1 : i32
    %48 = tpu.dynamic_rotate %47 by %c1_i32_20 dim 1 : vector<8x128xf32>, i32 -> vector<8x128xf32>
    %c1_i32_21 = arith.constant 1 : i32
    %49 = vector.broadcast %c1_i32_21 : i32 to vector<1x128xi32>
    %50 = arith.cmpi sge, %17, %49 : vector<1x128xi32>
    %cst_22 = arith.constant 0.000000e+00 : f32
    %51 = vector.shape_cast %50 : vector<1x128xi1> to vector<1x128xi1>
    %52 = vector.broadcast %51 : vector<1x128xi1> to vector<8x128xi1>
    %53 = vector.broadcast %cst_22 : f32 to vector<8x128xf32>
    %54 = arith.select %52, %48, %53 : vector<8x128xi1>, vector<8x128xf32>
    %c127_i32_23 = arith.constant 127 : i32
    %55 = tpu.dynamic_rotate %47 by %c127_i32_23 dim 1 : vector<8x128xf32>, i32 -> vector<8x128xf32>
    %c31_i32_24 = arith.constant 31 : i32
    %56 = vector.broadcast %c31_i32_24 : i32 to vector<1x128xi32>
    %57 = arith.cmpi slt, %17, %56 : vector<1x128xi32>
    %cst_25 = arith.constant 0.000000e+00 : f32
    %58 = vector.shape_cast %57 : vector<1x128xi1> to vector<1x128xi1>
    %59 = vector.broadcast %58 : vector<1x128xi1> to vector<8x128xi1>
    %60 = vector.broadcast %cst_25 : f32 to vector<8x128xf32>
    %61 = arith.select %59, %55, %60 : vector<8x128xi1>, vector<8x128xf32>
    %c0_26 = arith.constant 0 : index
    %c0_27 = arith.constant 0 : index
    %62 = vector.load %arg5[%c0_26, %c0_27] : memref<4x1xf32, #tpu.memory_space<vmem>>, vector<4x1xf32>
    %c0_28 = arith.constant 0 : index
    %c0_29 = arith.constant 0 : index
    %c0_30 = arith.constant 0 : index
    %63 = vector.load %arg4[%c0_28, %c0_29, %c0_30] : memref<3x4x8xf32, #tpu.memory_space<vmem>>, vector<1x4x8xf32>
    %64 = vector.shape_cast %63 : vector<1x4x8xf32> to vector<4x8xf32>
    %cst_31 = arith.constant dense<0.000000e+00> : vector<4x128xf32>
    %65 = tpu.matmul %64, %54, %cst_31 {dimension_numbers = #tpu.dot_dimension_numbers<[1], [0], [0], [1], [0, 0, 1, 1], [], []>} : vector<4x8xf32>, vector<8x128xf32>, vector<4x128xf32> -> vector<4x128xf32>
    %c1_32 = arith.constant 1 : index
    %c0_33 = arith.constant 0 : index
    %c0_34 = arith.constant 0 : index
    %66 = vector.load %arg4[%c1_32, %c0_33, %c0_34] : memref<3x4x8xf32, #tpu.memory_space<vmem>>, vector<1x4x8xf32>
    %67 = vector.shape_cast %66 : vector<1x4x8xf32> to vector<4x8xf32>
    %cst_35 = arith.constant dense<0.000000e+00> : vector<4x128xf32>
    %68 = tpu.matmul %67, %47, %cst_35 {dimension_numbers = #tpu.dot_dimension_numbers<[1], [0], [0], [1], [0, 0, 1, 1], [], []>} : vector<4x8xf32>, vector<8x128xf32>, vector<4x128xf32> -> vector<4x128xf32>
    %69 = arith.addf %65, %68 : vector<4x128xf32>
    %c2_36 = arith.constant 2 : index
    %c0_37 = arith.constant 0 : index
    %c0_38 = arith.constant 0 : index
    %70 = vector.load %arg4[%c2_36, %c0_37, %c0_38] : memref<3x4x8xf32, #tpu.memory_space<vmem>>, vector<1x4x8xf32>
    %71 = vector.shape_cast %70 : vector<1x4x8xf32> to vector<4x8xf32>
    %cst_39 = arith.constant dense<0.000000e+00> : vector<4x128xf32>
    %72 = tpu.matmul %71, %61, %cst_39 {dimension_numbers = #tpu.dot_dimension_numbers<[1], [0], [0], [1], [0, 0, 1, 1], [], []>} : vector<4x8xf32>, vector<8x128xf32>, vector<4x128xf32> -> vector<4x128xf32>
    %73 = arith.addf %69, %72 : vector<4x128xf32>
    %74 = vector.broadcast %62 : vector<4x1xf32> to vector<4x128xf32>
    %75 = arith.addf %73, %74 : vector<4x128xf32>
    %cst_40 = arith.constant 0.000000e+00 : f32
    %76 = vector.broadcast %cst_40 : f32 to vector<4x128xf32>
    %77 = arith.maximumf %75, %76 : vector<4x128xf32>
    %78 = arith.addf %77, %0 : vector<4x128xf32>
    %cst_41 = arith.constant dense<0.000000e+00> : vector<128xf32>
    %79 = vector.multi_reduction <add>, %78, %cst_41 [0] : vector<4x128xf32> to vector<128xf32>
    %80 = vector.shape_cast %79 : vector<128xf32> to vector<1x128xf32>
    %cst_42 = arith.constant 4.000000e+00 : f32
    %81 = vector.broadcast %cst_42 : f32 to vector<1x128xf32>
    %82 = arith.divf %80, %81 : vector<1x128xf32>
    %83 = vector.broadcast %82 : vector<1x128xf32> to vector<4x128xf32>
    %84 = arith.subf %78, %83 : vector<4x128xf32>
    %85 = arith.mulf %84, %84 : vector<4x128xf32>
    %cst_43 = arith.constant dense<0.000000e+00> : vector<128xf32>
    %86 = vector.multi_reduction <add>, %85, %cst_43 [0] : vector<4x128xf32> to vector<128xf32>
    %87 = vector.shape_cast %86 : vector<128xf32> to vector<1x128xf32>
    %cst_44 = arith.constant 4.000000e+00 : f32
    %88 = vector.broadcast %cst_44 : f32 to vector<1x128xf32>
    %89 = arith.divf %87, %88 : vector<1x128xf32>
    %cst_45 = arith.constant 9.99999974E-6 : f32
    %90 = vector.broadcast %cst_45 : f32 to vector<1x128xf32>
    %91 = arith.addf %89, %90 : vector<1x128xf32>
    %92 = math.rsqrt %91 : vector<1x128xf32>
    %93 = vector.broadcast %92 : vector<1x128xf32> to vector<4x128xf32>
    %94 = arith.mulf %84, %93 : vector<4x128xf32>
    %c0_46 = arith.constant 0 : index
    %c0_47 = arith.constant 0 : index
    %95 = vector.load %arg6[%c0_46, %c0_47] : memref<4x1xf32, #tpu.memory_space<vmem>>, vector<4x1xf32>
    %96 = vector.broadcast %95 : vector<4x1xf32> to vector<4x128xf32>
    %97 = arith.mulf %94, %96 : vector<4x128xf32>
    %c0_48 = arith.constant 0 : index
    %c0_49 = arith.constant 0 : index
    %98 = vector.load %arg7[%c0_48, %c0_49] : memref<4x1xf32, #tpu.memory_space<vmem>>, vector<4x1xf32>
    %99 = vector.broadcast %98 : vector<4x1xf32> to vector<4x128xf32>
    %100 = arith.addf %97, %99 : vector<4x128xf32>
    %c0_50 = arith.constant 0 : index
    %c0_51 = arith.constant 0 : index
    %101 = vector.load %arg8[%c0_50, %c0_51] : memref<4x128xf32, #tpu.memory_space<vmem>>, vector<4x128xf32>
    tpu.vector_store %arg8[%c0_50, %c0_51], %100 {strides = array<i32>} : memref<4x128xf32, #tpu.memory_space<vmem>>, vector<4x128xf32>,
    return
  }
  func.func @transform_0(%arg0: i32) -> (i32, i32) {
    %c0_i32 = arith.constant 0 : i32
    %c0_i32_0 = arith.constant 0 : i32
    return %c0_i32, %arg0 : i32, i32
  }
  func.func @transform_1(%arg0: i32) -> (i32, i32, i32) {
    %c0_i32 = arith.constant 0 : i32
    %c0_i32_0 = arith.constant 0 : i32
    %c0_i32_1 = arith.constant 0 : i32
    %c0_i32_2 = arith.constant 0 : i32
    return %c0_i32, %c0_i32_0, %c0_i32_1 : i32, i32, i32
  }
  func.func @transform_2(%arg0: i32) -> (i32, i32) {
    %c0_i32 = arith.constant 0 : i32
    %c0_i32_0 = arith.constant 0 : i32
    %c0_i32_1 = arith.constant 0 : i32
    return %c0_i32, %c0_i32_0 : i32, i32
  }
  func.func @transform_3(%arg0: i32) -> (i32, i32, i32) {
    %c0_i32 = arith.constant 0 : i32
    %c0_i32_0 = arith.constant 0 : i32
    %c0_i32_1 = arith.constant 0 : i32
    %c0_i32_2 = arith.constant 0 : i32
    return %c0_i32, %c0_i32_0, %c0_i32_1 : i32, i32, i32
  }
  func.func @transform_4(%arg0: i32) -> (i32, i32) {
    %c0_i32 = arith.constant 0 : i32
    %c0_i32_0 = arith.constant 0 : i32
    %c0_i32_1 = arith.constant 0 : i32
    return %c0_i32, %c0_i32_0 : i32, i32
  }
  func.func @transform_5(%arg0: i32) -> (i32, i32) {
    %c0_i32 = arith.constant 0 : i32
    %c0_i32_0 = arith.constant 0 : i32
    %c0_i32_1 = arith.constant 0 : i32
    return %c0_i32, %c0_i32_0 : i32, i32
  }
  func.func @transform_6(%arg0: i32) -> (i32, i32) {
    %c0_i32 = arith.constant 0 : i32
    %c0_i32_0 = arith.constant 0 : i32
    %c0_i32_1 = arith.constant 0 : i32
    return %c0_i32, %c0_i32_0 : i32, i32
  }
  func.func @transform_7(%arg0: i32) -> (i32, i32) {
    %c0_i32 = arith.constant 0 : i32
    %c0_i32_0 = arith.constant 0 : i32
    return %c0_i32, %arg0 : i32, i32
  }
}

</mosaic_0001>

<llo_original>
// kernel: tpu_custom_call.1
$region0: #{tpu_custom_call.1}
  #allocation0 [shape = 'u32[]', space=smem, size = 0x4, offset = 0x4, fixed_abs, tag = 'smem constant byte address 0x4 - core index']
  #allocation1 [shape = 'u32[144,128]{1,0:T(1,128)}', space=vmem, size = 0x12000, scoped, tag = 'internal scratch']
  %s0 = inlined_call_operand.vmem [shape: f32[4,512], index: 0, kind: input, shape index: {}]
  %s1 = inlined_call_operand.vmem [shape: f32[3,8,4], index: 1, kind: input, shape index: {}]
  %s2 = inlined_call_operand.vmem [shape: f32[8,1], index: 2, kind: input, shape index: {}]
  %s3 = inlined_call_operand.vmem [shape: f32[3,4,8], index: 3, kind: input, shape index: {}]
  %s4 = inlined_call_operand.vmem [shape: f32[4,1], index: 4, kind: input, shape index: {}]
  %s5 = inlined_call_operand.vmem [shape: f32[4,1], index: 5, kind: input, shape index: {}]
  %s6 = inlined_call_operand.vmem [shape: f32[4,1], index: 6, kind: input, shape index: {}]
  %s7 = inlined_call_operand.hbm [shape: f32[4,512], index: 7, kind: output, shape index: {}]
  %s8 = sld [smem:[#allocation0]]
  $region61: #{tpu_custom_call.1} parent=0
    _
  %s10 = ssub.s32 1, %s8
  %s11 = scalar_select 0, %s10, %s8
  $region1: #{tpu_custom_call.1} parent=0
    #allocation2 [shape = 'u8[4096]{0}', space=vmem, size = 0x1000, scoped, tag = 'output window, operand 0']
    #allocation3 [shape = 's32[2]{0}', space=sflag, size = 0x8, scoped, tag = 'scoped memory for tpu_custom_call.1']
    %12 = vsyncpa [#allocation3], 0
    %s13 = scalar_lea.sflag [#allocation3], 1
    %14 = vsyncpa %s13, 0
    loop: start=0, step=1, limit=6
    $region2: #{tpu_custom_call.1} parent=1 // loop_pre_header
      _
    $region3: #{tpu_custom_call.1} parent=1 // loop_header
      %s16 = sphi 0, %s20
      %p17 = scmp.ge.s32.totalorder %s16, 6
      %s26 = sphi 0, %s28
      %s29 = sphi 0, %s26
      %s30 = sphi 0, %s29
      %s46 = sphi 0, %s30
      %s50 = sphi 0, %s50
      %s52 = sphi 0, %s50
      %s53 = sphi 0, %s52
      %s67 = sphi 0, %s53
      %s71 = sphi 0, %s71
      %s73 = sphi 0, %s71
      %s74 = sphi 0, %s73
      %s88 = sphi 0, %s74
      %s92 = sphi 0, %s92
      %s94 = sphi 0, %s92
      %s95 = sphi 0, %s94
      %s109 = sphi 0, %s95
      %s113 = sphi 0, %s113
      %s115 = sphi 0, %s113
      %s116 = sphi 0, %s115
      %s130 = sphi 0, %s116
      %s134 = sphi 0, %s134
      %s136 = sphi 0, %s134
      %s137 = sphi 0, %s136
      %s151 = sphi 0, %s137
      %s155 = sphi 0, %s155
      %s157 = sphi 0, %s155
      %s158 = sphi 0, %s157
      %s172 = sphi 0, %s158
      %s178 = sphi 0, %s180
      %s181 = sphi 0, %s178
      %s182 = sphi 0, %s181
      %s198 = sphi 0, %s182
    $region4: #{tpu_custom_call.1} parent=1 // loop_header_branch
      %19 = sbr.rel (%p17) target = $region8
    $region5: #{tpu_custom_call.1} parent=1 // loop_body
      %s21 = ssub.s32 %s16, 1
      %s22 = ssub.s32 %s16, 2
      %s23 = sadd.s32 %s16, 1
      %s24 = ssub.s32 %s16, %s23
      %p25 = scmp.eq.s32.totalorder %s24, 0
      %s27 = sadd.s32 %s26, 1
      %s28 = scalar_select %p25, %s26, %s27
      %p31 = pneg %p25
      %p32 = scmp.eq.s32.totalorder %s16, 3
      %p33 = por %p31, %p32
      %p34 = scmp.ne.s32.totalorder %s26, %s29
      %p35 = scmp.eq.s32.totalorder %s16, 0
      %p36 = por %p34, %p35
      %p37 = scmp.ne.s32.totalorder %s26, %s29
      %p38 = scmp.eq.s32.totalorder %s21, 3
      %p39 = por %p37, %p38
      %p40 = scmp.ne.s32.totalorder %s29, %s30
      %p41 = scmp.eq.s32.totalorder %s21, 0
      %p42 = por %p40, %p41
      %p43 = scmp.ne.s32.totalorder %s29, %s30
      %p44 = scmp.eq.s32.totalorder %s22, 3
      %p45 = por %p43, %p44
      %p47 = scmp.ne.s32.totalorder %s30, %s46
      %p48 = scmp.eq.s32.totalorder %s22, 0
      %p49 = por %p47, %p48
      %s51 = sadd.s32 %s50, 1
      %p54 = scmp.eq.s32.totalorder %s16, 3
      %p55 = scmp.ne.s32.totalorder %s50, %s52
      %p56 = scmp.eq.s32.totalorder %s16, 0
      %p57 = por %p55, %p56
      %p58 = scmp.ne.s32.totalorder %s50, %s52
      %p59 = scmp.eq.s32.totalorder %s21, 3
      %p60 = por %p58, %p59
      %p61 = scmp.ne.s32.totalorder %s52, %s53
      %p62 = scmp.eq.s32.totalorder %s21, 0
      %p63 = por %p61, %p62
      %p64 = scmp.ne.s32.totalorder %s52, %s53
      %p65 = scmp.eq.s32.totalorder %s22, 3
      %p66 = por %p64, %p65
      %p68 = scmp.ne.s32.totalorder %s53, %s67
      %p69 = scmp.eq.s32.totalorder %s22, 0
      %p70 = por %p68, %p69
      %s72 = sadd.s32 %s71, 1
      %p75 = scmp.eq.s32.totalorder %s16, 3
      %p76 = scmp.ne.s32.totalorder %s71, %s73
      %p77 = scmp.eq.s32.totalorder %s16, 0
      %p78 = por %p76, %p77
      %p79 = scmp.ne.s32.totalorder %s71, %s73
      %p80 = scmp.eq.s32.totalorder %s21, 3
      %p81 = por %p79, %p80
      %p82 = scmp.ne.s32.totalorder %s73, %s74
      %p83 = scmp.eq.s32.totalorder %s21, 0
      %p84 = por %p82, %p83
      %p85 = scmp.ne.s32.totalorder %s73, %s74
      %p86 = scmp.eq.s32.totalorder %s22, 3
      %p87 = por %p85, %p86
      %p89 = scmp.ne.s32.totalorder %s74, %s88
      %p90 = scmp.eq.s32.totalorder %s22, 0
      %p91 = por %p89, %p90
      %s93 = sadd.s32 %s92, 1
      %p96 = scmp.eq.s32.totalorder %s16, 3
      %p97 = scmp.ne.s32.totalorder %s92, %s94
      %p98 = scmp.eq.s32.totalorder %s16, 0
      %p99 = por %p97, %p98
      %p100 = scmp.ne.s32.totalorder %s92, %s94
      %p101 = scmp.eq.s32.totalorder %s21, 3
      %p102 = por %p100, %p101
      %p103 = scmp.ne.s32.totalorder %s94, %s95
      %p104 = scmp.eq.s32.totalorder %s21, 0
      %p105 = por %p103, %p104
      %p106 = scmp.ne.s32.totalorder %s94, %s95
      %p107 = scmp.eq.s32.totalorder %s22, 3
      %p108 = por %p106, %p107
      %p110 = scmp.ne.s32.totalorder %s95, %s109
      %p111 = scmp.eq.s32.totalorder %s22, 0
      %p112 = por %p110, %p111
      %s114 = sadd.s32 %s113, 1
      %p117 = scmp.eq.s32.totalorder %s16, 3
      %p118 = scmp.ne.s32.totalorder %s113, %s115
      %p119 = scmp.eq.s32.totalorder %s16, 0
      %p120 = por %p118, %p119
      %p121 = scmp.ne.s32.totalorder %s113, %s115
      %p122 = scmp.eq.s32.totalorder %s21, 3
      %p123 = por %p121, %p122
      %p124 = scmp.ne.s32.totalorder %s115, %s116
      %p125 = scmp.eq.s32.totalorder %s21, 0
      %p126 = por %p124, %p125
      %p127 = scmp.ne.s32.totalorder %s115, %s116
      %p128 = scmp.eq.s32.totalorder %s22, 3
      %p129 = por %p127, %p128
      %p131 = scmp.ne.s32.totalorder %s116, %s130
      %p132 = scmp.eq.s32.totalorder %s22, 0
      %p133 = por %p131, %p132
      %s135 = sadd.s32 %s134, 1
      %p138 = scmp.eq.s32.totalorder %s16, 3
      %p139 = scmp.ne.s32.totalorder %s134, %s136
      %p140 = scmp.eq.s32.totalorder %s16, 0
      %p141 = por %p139, %p140
      %p142 = scmp.ne.s32.totalorder %s134, %s136
      %p143 = scmp.eq.s32.totalorder %s21, 3
      %p144 = por %p142, %p143
      %p145 = scmp.ne.s32.totalorder %s136, %s137
      %p146 = scmp.eq.s32.totalorder %s21, 0
      %p147 = por %p145, %p146
      %p148 = scmp.ne.s32.totalorder %s136, %s137
      %p149 = scmp.eq.s32.totalorder %s22, 3
      %p150 = por %p148, %p149
      %p152 = scmp.ne.s32.totalorder %s137, %s151
      %p153 = scmp.eq.s32.totalorder %s22, 0
      %p154 = por %p152, %p153
      %s156 = sadd.s32 %s155, 1
      %p159 = scmp.eq.s32.totalorder %s16, 3
      %p160 = scmp.ne.s32.totalorder %s155, %s157
      %p161 = scmp.eq.s32.totalorder %s16, 0
      %p162 = por %p160, %p161
      %p163 = scmp.ne.s32.totalorder %s155, %s157
      %p164 = scmp.eq.s32.totalorder %s21, 3
      %p165 = por %p163, %p164
      %p166 = scmp.ne.s32.totalorder %s157, %s158
      %p167 = scmp.eq.s32.totalorder %s21, 0
      %p168 = por %p166, %p167
      %p169 = scmp.ne.s32.totalorder %s157, %s158
      %p170 = scmp.eq.s32.totalorder %s22, 3
      %p171 = por %p169, %p170
      %p173 = scmp.ne.s32.totalorder %s158, %s172
      %p174 = scmp.eq.s32.totalorder %s22, 0
      %p175 = por %p173, %p174
      %s176 = ssub.s32 %s16, %s23
      %p177 = scmp.eq.s32.totalorder %s176, 0
      %s179 = sadd.s32 %s178, 1
      %s180 = scalar_select %p177, %s178, %s179
      %p183 = pneg %p177
      %p184 = scmp.eq.s32.totalorder %s16, 3
      %p185 = por %p183, %p184
      %p186 = scmp.ne.s32.totalorder %s178, %s181
      %p187 = scmp.eq.s32.totalorder %s16, 0
      %p188 = por %p186, %p187
      %p189 = scmp.ne.s32.totalorder %s178, %s181
      %p190 = scmp.eq.s32.totalorder %s21, 3
      %p191 = por %p189, %p190
      %p192 = scmp.ne.s32.totalorder %s181, %s182
      %p193 = scmp.eq.s32.totalorder %s21, 0
      %p194 = por %p192, %p193
      %p195 = scmp.ne.s32.totalorder %s181, %s182
      %p196 = scmp.eq.s32.totalorder %s22, 3
      %p197 = por %p195, %p196
      %p199 = scmp.ne.s32.totalorder %s182, %s198
      %p200 = scmp.eq.s32.totalorder %s22, 0
      %p201 = por %p199, %p200
      %p202 = scmp.le.s32.totalorder 1, %s16
      %p203 = scmp.lt.s32.totalorder %s16, 5
      %p204 = pnand %p202, %p203
      %p205 = pneg %p204
      // Predicated region
      $region9: #{tpu_custom_call.1} parent=5 // pred_check
        _
      $region10: #{tpu_custom_call.1} parent=5 // pred_check_branch
        %207 = sbr.rel (%p204) target = $region12
      $region11: #{tpu_custom_call.1} parent=5 // pred_region
        %s208 = ssub.s32 %s16, 1
        // Predicated region
        $region13: #{tpu_custom_call.1} parent=11 // pred_check
          %p209 = pneg %p63
        $region14: #{tpu_custom_call.1} parent=11 // pred_check_branch
          %211 = sbr.rel (%p209) target = $region16
        $region15: #{tpu_custom_call.1} parent=11 // pred_region
          _
        $region16: #{tpu_custom_call.1} parent=11 // pred_fallthru
          _
        // Predicated region
        $region17: #{tpu_custom_call.1} parent=11 // pred_check
          %p212 = pneg %p84
        $region18: #{tpu_custom_call.1} parent=11 // pred_check_branch
          %214 = sbr.rel (%p212) target = $region20
        $region19: #{tpu_custom_call.1} parent=11 // pred_region
          _
        $region20: #{tpu_custom_call.1} parent=11 // pred_fallthru
          _
        // Predicated region
        $region21: #{tpu_custom_call.1} parent=11 // pred_check
          %p215 = pneg %p105
        $region22: #{tpu_custom_call.1} parent=11 // pred_check_branch
          %217 = sbr.rel (%p215) target = $region24
        $region23: #{tpu_custom_call.1} parent=11 // pred_region
          _
        $region24: #{tpu_custom_call.1} parent=11 // pred_fallthru
          _
        // Predicated region
        $region25: #{tpu_custom_call.1} parent=11 // pred_check
          %p218 = pneg %p126
        $region26: #{tpu_custom_call.1} parent=11 // pred_check_branch
          %220 = sbr.rel (%p218) target = $region28
        $region27: #{tpu_custom_call.1} parent=11 // pred_region
          _
        $region28: #{tpu_custom_call.1} parent=11 // pred_fallthru
          _
        // Predicated region
        $region29: #{tpu_custom_call.1} parent=11 // pred_check
          %p221 = pneg %p147
        $region30: #{tpu_custom_call.1} parent=11 // pred_check_branch
          %223 = sbr.rel (%p221) target = $region32
        $region31: #{tpu_custom_call.1} parent=11 // pred_region
          _
        $region32: #{tpu_custom_call.1} parent=11 // pred_fallthru
          _
        // Predicated region
        $region33: #{tpu_custom_call.1} parent=11 // pred_check
          %p224 = pneg %p168
        $region34: #{tpu_custom_call.1} parent=11 // pred_check_branch
          %226 = sbr.rel (%p224) target = $region36
        $region35: #{tpu_custom_call.1} parent=11 // pred_region
          _
        $region36: #{tpu_custom_call.1} parent=11 // pred_fallthru
          _
      $region12: #{tpu_custom_call.1} parent=5 // pred_fallthru
        _
      %p227 = scmp.lt.s32.totalorder %s16, 4
      // Predicated region
      $region37: #{tpu_custom_call.1} parent=5 // pred_check
        %p228 = pneg %p227
      $region38: #{tpu_custom_call.1} parent=5 // pred_check_branch
        %230 = sbr.rel (%p228) target = $region40
      $region39: #{tpu_custom_call.1} parent=5 // pred_region
        // Predicated region
        $region41: #{tpu_custom_call.1} parent=39 // pred_check
          %p231 = pneg %p36
        $region42: #{tpu_custom_call.1} parent=39 // pred_check_branch
          %233 = sbr.rel (%p231) target = $region44
        $region43: #{tpu_custom_call.1} parent=39 // pred_region
          %p234 = scmp.lt.s32.totalorder %s16, 3
          %s235 = scalar_select %p234, %s16, 3
          %s236 = smul.addr %s235, 4
          %s237 = scalar_lea.vmem %s0, %s236
        $region44: #{tpu_custom_call.1} parent=39 // pred_fallthru
          _
      $region40: #{tpu_custom_call.1} parent=5 // pred_fallthru
        _
      %p238 = scmp.le.s32.totalorder 1, %s16
      %p239 = scmp.lt.s32.totalorder %s16, 5
      %p240 = pnand %p238, %p239
      %p241 = pneg %p240
      // Predicated region
      $region45: #{tpu_custom_call.1} parent=5 // pred_check
        _
      $region46: #{tpu_custom_call.1} parent=5 // pred_check_branch
        %243 = sbr.rel (%p240) target = $region48
      $region47: #{tpu_custom_call.1} parent=5 // pred_region
        %s244 = ssub.s32 %s16, 1
        %p245 = scmp.lt.s32.totalorder %s21, 3
        %s246 = scalar_select %p245, %s21, 3
        %s247 = smul.addr %s246, 4
        %s248 = scalar_lea.vmem %s0, %s247
        %p249 = pneg %p42
        %p250 = pneg %p39
        %p251 = pneg %p63
        %p252 = pneg %p60
        %p253 = pneg %p84
        %p254 = pneg %p81
        %p255 = pneg %p105
        %p256 = pneg %p102
        %p257 = pneg %p126
        %p258 = pneg %p123
        %p259 = pneg %p147
        %p260 = pneg %p144
        %p261 = pneg %p168
        %p262 = pneg %p165
        %p263 = pneg %p194
        %p264 = pneg %p191
        %s265 = sand.u32 %s181, 1
        %s266 = scalar_lea.sflag [#allocation3], %s265
        %s267 = sand.u32 %s181, 1
        %s268 = smul.addr %s267, 4
        %s269 = scalar_lea.vmem [#allocation2], %s268
        %p270 = scmp.lt.s32.totalorder %s21, 3
        %s271 = scalar_select %p270, %s21, 3
        %s272 = smul.addr %s271, 4
        %s273 = scalar_lea.vmem %s0, %s272
        %v274 = vld [vmem:[%s273] sm:$0xf]
        %v275 = vlaneseq
        %v276 = vand.u32 %v275, 127
        %vm277 = vcmp.lt.s32.totalorder %v276, 0
        %v278 = vsub.s32 0, %v276
        %v279 = vsel %vm277, %v278, %v276
        %v280 = vshrl.u32 %v279, 5
        %v281 = vand.u32 %v279, 31
        %v282 = vsub.s32 0, %v281
        %v283 = vsel %vm277, %v282, %v281
        %vm284 = vcmp.ne.s32.totalorder %v283, 0
        %vm285 = vcmp.lt.s32.totalorder %v283, 0
        %vm286 = vmand %vm285, %vm284
        %v287 = vadd.s32 %v283, 32
        %v288 = vsel %vm286, %v287, %v283
        %289 = vrot.lane.b32.xlu0 %v274, 1
        %v290 = vpop.permute.xlu0 %289
        %vm291 = vcmp.ge.s32.totalorder %v288, 1
        %v292 = vsel %vm291, 1, 0
        %vm293 = vcmp.eq.s32.totalorder %v292, 1
        %v294 = vsel %vm293, %v290, 0.0
        %295 = vrot.lane.b32.xlu0 %v274, 127
        %v296 = vpop.permute.xlu0 %295
        %vm297 = vcmp.lt.s32.totalorder %v288, 31
        %v298 = vsel %vm297, 1, 0
        %vm299 = vcmp.eq.s32.totalorder %v298, 1
        %v300 = vsel %vm299, %v296, 0.0
        %v301 = vld [vmem:[%s2] sm:$0xff]
        %v302 = vld [vmem:[%s1] sm:$0xff]
        %s303 = scalar_lea.vmem %s1, 8
        %v304 = vld [vmem:[%s303] sm:$0xff]
        %vm305 = vcmask 31744
        %v307 = vsel %vm305, %v304, 0
        %vm309 = vcmask 1043456
        %v311 = vsel %vm309, %v274, 0
        %313 = vmatprep.subr.mxu0 0.0
        %314 = vmatpush1.msra.mxu0 %v311
        %315 = vmatprep.subr.mxu0 0.0
        %316 = vmatpush1.msra.mxu0 0.0
        %317 = vmatprep.subr.mxu0 0.0
        %318 = vmatpush1.msra.mxu0 0.0
        %319 = vmatprep.subr.mxu0 0.0
        %320 = vmatpush1.msra.mxu0 0.0
        %321 = vmatprep.subr.mxu0 0.0
        %322 = vmatpush1.msra.mxu0 0.0
        %323 = vmatprep.subr.mxu0 0.0
        %324 = vmatpush1.msra.mxu0 0.0
        %325 = vmatprep.subr.mxu0 0.0
        %326 = vmatpush1.msra.mxu0 0.0
        %327 = vmatprep.subr.mxu0 0.0
        %328 = vmatpush1.msra.mxu0 0.0
        %329 = vmatprep.subr.mxu0 0.0
        %330 = vmatpush1.msra.mxu0 0.0
        %331 = vmatprep.subr.mxu0 0.0
        %332 = vmatpush1.msra.mxu0 0.0
        %333 = vmatprep.subr.mxu0 0.0
        %334 = vmatpush1.msra.mxu0 0.0
        %335 = vmatprep.subr.mxu0 0.0
        %336 = vmatpush1.msra.mxu0 0.0
        %337 = vmatprep.subr.mxu0 0.0
        %338 = vmatpush1.msra.mxu0 0.0
        %339 = vmatprep.subr.mxu0 0.0
        %340 = vmatpush1.msra.mxu0 0.0
        %341 = vmatprep.subr.mxu0 0.0
        %342 = vmatpush1.msra.mxu0 0.0
        %343 = vmatprep.subr.mxu0 0.0
        %344 = vmatpush1.msra.mxu0 0.0
        %345 = vmatprep.subr.mxu0 0.0
        %346 = vmatpush1.msra.mxu0 0.0
        %347 = vmatprep.subr.mxu0 0.0
        %348 = vmatpush1.msra.mxu0 0.0
        %349 = vmatprep.subr.mxu0 0.0
        %350 = vmatpush1.msra.mxu0 0.0
        %351 = vmatprep.subr.mxu0 0.0
        %352 = vmatpush1.msra.mxu0 0.0
        %353 = vmatprep.subr.mxu0 0.0
        %354 = vmatpush1.msra.mxu0 0.0
        %355 = vmatprep.subr.mxu0 0.0
        %356 = vmatpush1.msra.mxu0 0.0
        %357 = vmatprep.subr.mxu0 0.0
        %358 = vmatpush1.msra.mxu0 0.0
        %359 = vmatprep.subr.mxu0 0.0
        %360 = vmatpush1.msra.mxu0 0.0
        %361 = vmatprep.subr.mxu0 0.0
        %362 = vmatpush1.msra.mxu0 0.0
        %363 = vmatprep.subr.mxu0 0.0
        %364 = vmatpush1.msra.mxu0 0.0
        %365 = vmatprep.subr.mxu0 0.0
        %366 = vmatpush1.msra.mxu0 0.0
        %367 = vmatprep.subr.mxu0 0.0
        %368 = vmatpush1.msra.mxu0 0.0
        %369 = vmatprep.subr.mxu0 0.0
        %370 = vmatpush1.msra.mxu0 0.0
        %371 = vmatprep.subr.mxu0 0.0
        %372 = vmatpush1.msra.mxu0 0.0
        %373 = vmatprep.subr.mxu0 0.0
        %374 = vmatpush1.msra.mxu0 0.0
        %375 = vmatprep.subr.mxu0 0.0
        %376 = vmatpush1.msra.mxu0 0.0
        %377 = vmatprep.mubr.f32.mxu0 0.0
        %378 = vmatmul.mubr.f32.gmra.mrb[0].mxu0 %v307
        %v379 = vpop.f32.mrb[0].mxu0
        %v380 = vadd.f32 0.0, %v379
        %v381 = vpop.f32.mrb[0].mxu0
        %382 = vdwg.mxu0
        %v384 = vsel %vm305, %v302, 0
        %v387 = vsel %vm309, %v294, 0
        %389 = vmatprep.subr.mxu0 0.0
        %390 = vmatpush1.msra.mxu0 %v387
        %391 = vmatprep.subr.mxu0 0.0
        %392 = vmatpush1.msra.mxu0 0.0
        %393 = vmatprep.subr.mxu0 0.0
        %394 = vmatpush1.msra.mxu0 0.0
        %395 = vmatprep.subr.mxu0 0.0
        %396 = vmatpush1.msra.mxu0 0.0
        %397 = vmatprep.subr.mxu0 0.0
        %398 = vmatpush1.msra.mxu0 0.0
        %399 = vmatprep.subr.mxu0 0.0
        %400 = vmatpush1.msra.mxu0 0.0
        %401 = vmatprep.subr.mxu0 0.0
        %402 = vmatpush1.msra.mxu0 0.0
        %403 = vmatprep.subr.mxu0 0.0
        %404 = vmatpush1.msra.mxu0 0.0
        %405 = vmatprep.subr.mxu0 0.0
        %406 = vmatpush1.msra.mxu0 0.0
        %407 = vmatprep.subr.mxu0 0.0
        %408 = vmatpush1.msra.mxu0 0.0
        %409 = vmatprep.subr.mxu0 0.0
        %410 = vmatpush1.msra.mxu0 0.0
        %411 = vmatprep.subr.mxu0 0.0
        %412 = vmatpush1.msra.mxu0 0.0
        %413 = vmatprep.subr.mxu0 0.0
        %414 = vmatpush1.msra.mxu0 0.0
        %415 = vmatprep.subr.mxu0 0.0
        %416 = vmatpush1.msra.mxu0 0.0
        %417 = vmatprep.subr.mxu0 0.0
        %418 = vmatpush1.msra.mxu0 0.0
        %419 = vmatprep.subr.mxu0 0.0
        %420 = vmatpush1.msra.mxu0 0.0
        %421 = vmatprep.subr.mxu0 0.0
        %422 = vmatpush1.msra.mxu0 0.0
        %423 = vmatprep.subr.mxu0 0.0
        %424 = vmatpush1.msra.mxu0 0.0
        %425 = vmatprep.subr.mxu0 0.0
        %426 = vmatpush1.msra.mxu0 0.0
        %427 = vmatprep.subr.mxu0 0.0
        %428 = vmatpush1.msra.mxu0 0.0
        %429 = vmatprep.subr.mxu0 0.0
        %430 = vmatpush1.msra.mxu0 0.0
        %431 = vmatprep.subr.mxu0 0.0
        %432 = vmatpush1.msra.mxu0 0.0
        %433 = vmatprep.subr.mxu0 0.0
        %434 = vmatpush1.msra.mxu0 0.0
        %435 = vmatprep.subr.mxu0 0.0
        %436 = vmatpush1.msra.mxu0 0.0
        %437 = vmatprep.subr.mxu0 0.0
        %438 = vmatpush1.msra.mxu0 0.0
        %439 = vmatprep.subr.mxu0 0.0
        %440 = vmatpush1.msra.mxu0 0.0
        %441 = vmatprep.subr.mxu0 0.0
        %442 = vmatpush1.msra.mxu0 0.0
        %443 = vmatprep.subr.mxu0 0.0
        %444 = vmatpush1.msra.mxu0 0.0
        %445 = vmatprep.subr.mxu0 0.0
        %446 = vmatpush1.msra.mxu0 0.0
        %447 = vmatprep.subr.mxu0 0.0
        %448 = vmatpush1.msra.mxu0 0.0
        %449 = vmatprep.subr.mxu0 0.0
        %450 = vmatpush1.msra.mxu0 0.0
        %451 = vmatprep.subr.mxu0 0.0
        %452 = vmatpush1.msra.mxu0 0.0
        %453 = vmatprep.mubr.f32.mxu0 0.0
        %454 = vmatmul.mubr.f32.gmra.mrb[0].mxu0 %v384
        %v455 = vpop.f32.mrb[0].mxu0
        %v456 = vadd.f32 %v380, %v455
        %v457 = vpop.f32.mrb[0].mxu0
        %458 = vdwg.mxu0
        %s459 = scalar_lea.vmem %s1, 16
        %v460 = vld [vmem:[%s459] sm:$0xff]
        %v462 = vsel %vm305, %v460, 0
        %v465 = vsel %vm309, %v300, 0
        %467 = vmatprep.subr.mxu0 0.0
        %468 = vmatpush1.msra.mxu0 %v465
        %469 = vmatprep.subr.mxu0 0.0
        %470 = vmatpush1.msra.mxu0 0.0
        %471 = vmatprep.subr.mxu0 0.0
        %472 = vmatpush1.msra.mxu0 0.0
        %473 = vmatprep.subr.mxu0 0.0
        %474 = vmatpush1.msra.mxu0 0.0
        %475 = vmatprep.subr.mxu0 0.0
        %476 = vmatpush1.msra.mxu0 0.0
        %477 = vmatprep.subr.mxu0 0.0
        %478 = vmatpush1.msra.mxu0 0.0
        %479 = vmatprep.subr.mxu0 0.0
        %480 = vmatpush1.msra.mxu0 0.0
        %481 = vmatprep.subr.mxu0 0.0
        %482 = vmatpush1.msra.mxu0 0.0
        %483 = vmatprep.subr.mxu0 0.0
        %484 = vmatpush1.msra.mxu0 0.0
        %485 = vmatprep.subr.mxu0 0.0
        %486 = vmatpush1.msra.mxu0 0.0
        %487 = vmatprep.subr.mxu0 0.0
        %488 = vmatpush1.msra.mxu0 0.0
        %489 = vmatprep.subr.mxu0 0.0
        %490 = vmatpush1.msra.mxu0 0.0
        %491 = vmatprep.subr.mxu0 0.0
        %492 = vmatpush1.msra.mxu0 0.0
        %493 = vmatprep.subr.mxu0 0.0
        %494 = vmatpush1.msra.mxu0 0.0
        %495 = vmatprep.subr.mxu0 0.0
        %496 = vmatpush1.msra.mxu0 0.0
        %497 = vmatprep.subr.mxu0 0.0
        %498 = vmatpush1.msra.mxu0 0.0
        %499 = vmatprep.subr.mxu0 0.0
        %500 = vmatpush1.msra.mxu0 0.0
        %501 = vmatprep.subr.mxu0 0.0
        %502 = vmatpush1.msra.mxu0 0.0
        %503 = vmatprep.subr.mxu0 0.0
        %504 = vmatpush1.msra.mxu0 0.0
        %505 = vmatprep.subr.mxu0 0.0
        %506 = vmatpush1.msra.mxu0 0.0
        %507 = vmatprep.subr.mxu0 0.0
        %508 = vmatpush1.msra.mxu0 0.0
        %509 = vmatprep.subr.mxu0 0.0
        %510 = vmatpush1.msra.mxu0 0.0
        %511 = vmatprep.subr.mxu0 0.0
        %512 = vmatpush1.msra.mxu0 0.0
        %513 = vmatprep.subr.mxu0 0.0
        %514 = vmatpush1.msra.mxu0 0.0
        %515 = vmatprep.subr.mxu0 0.0
        %516 = vmatpush1.msra.mxu0 0.0
        %517 = vmatprep.subr.mxu0 0.0
        %518 = vmatpush1.msra.mxu0 0.0
        %519 = vmatprep.subr.mxu0 0.0
        %520 = vmatpush1.msra.mxu0 0.0
        %521 = vmatprep.subr.mxu0 0.0
        %522 = vmatpush1.msra.mxu0 0.0
        %523 = vmatprep.subr.mxu0 0.0
        %524 = vmatpush1.msra.mxu0 0.0
        %525 = vmatprep.subr.mxu0 0.0
        %526 = vmatpush1.msra.mxu0 0.0
        %527 = vmatprep.subr.mxu0 0.0
        %528 = vmatpush1.msra.mxu0 0.0
        %529 = vmatprep.subr.mxu0 0.0
        %530 = vmatpush1.msra.mxu0 0.0
        %531 = vmatprep.mubr.f32.mxu0 0.0
        %532 = vmatmul.mubr.f32.gmra.mrb[0].mxu0 %v462
        %v533 = vpop.f32.mrb[0].mxu0
        %v534 = vadd.f32 0.0, %v533
        %v535 = vpop.f32.mrb[0].mxu0
        %536 = vdwg.mxu0
        %v537 = vadd.f32 %v456, %v534
        %539 = vset.pattern.permute.xlu0 0
        %540 = vperm.xlu0 %539, %v301
        %v541 = vpop.permute.xlu0 %540
        %v543 = vadd.f32 %v537, %v541
        %v544 = vmax.f32 %v543, 0.0
        %545 = vrot.lane.b32.xlu0 %v544, 1
        %v546 = vpop.permute.xlu0 %545
        %v547 = vsel %vm293, %v546, 0.0
        %548 = vrot.lane.b32.xlu0 %v544, 127
        %v549 = vpop.permute.xlu0 %548
        %v550 = vsel %vm299, %v549, 0.0
        %v551 = vld [vmem:[%s4] sm:$0xf]
        %v552 = vld [vmem:[%s3] sm:$0xf]
        %s553 = scalar_lea.vmem %s3, 4
        %v554 = vld [vmem:[%s553] sm:$0xf]
        %vm555 = vcmask 64512
        %v557 = vsel %vm555, %v554, 0
        %559 = vmatprep.subr.mxu0 0.0
        %560 = vmatpush1.msra.mxu0 %v544
        %561 = vmatprep.subr.mxu0 0.0
        %562 = vmatpush1.msra.mxu0 0.0
        %563 = vmatprep.subr.mxu0 0.0
        %564 = vmatpush1.msra.mxu0 0.0
        %565 = vmatprep.subr.mxu0 0.0
        %566 = vmatpush1.msra.mxu0 0.0
        %567 = vmatprep.subr.mxu0 0.0
        %568 = vmatpush1.msra.mxu0 0.0
        %569 = vmatprep.subr.mxu0 0.0
        %570 = vmatpush1.msra.mxu0 0.0
        %571 = vmatprep.subr.mxu0 0.0
        %572 = vmatpush1.msra.mxu0 0.0
        %573 = vmatprep.subr.mxu0 0.0
        %574 = vmatpush1.msra.mxu0 0.0
        %575 = vmatprep.subr.mxu0 0.0
        %576 = vmatpush1.msra.mxu0 0.0
        %577 = vmatprep.subr.mxu0 0.0
        %578 = vmatpush1.msra.mxu0 0.0
        %579 = vmatprep.subr.mxu0 0.0
        %580 = vmatpush1.msra.mxu0 0.0
        %581 = vmatprep.subr.mxu0 0.0
        %582 = vmatpush1.msra.mxu0 0.0
        %583 = vmatprep.subr.mxu0 0.0
        %584 = vmatpush1.msra.mxu0 0.0
        %585 = vmatprep.subr.mxu0 0.0
        %586 = vmatpush1.msra.mxu0 0.0
        %587 = vmatprep.subr.mxu0 0.0
        %588 = vmatpush1.msra.mxu0 0.0
        %589 = vmatprep.subr.mxu0 0.0
        %590 = vmatpush1.msra.mxu0 0.0
        %591 = vmatprep.subr.mxu0 0.0
        %592 = vmatpush1.msra.mxu0 0.0
        %593 = vmatprep.subr.mxu0 0.0
        %594 = vmatpush1.msra.mxu0 0.0
        %595 = vmatprep.subr.mxu0 0.0
        %596 = vmatpush1.msra.mxu0 0.0
        %597 = vmatprep.subr.mxu0 0.0
        %598 = vmatpush1.msra.mxu0 0.0
        %599 = vmatprep.subr.mxu0 0.0
        %600 = vmatpush1.msra.mxu0 0.0
        %601 = vmatprep.subr.mxu0 0.0
        %602 = vmatpush1.msra.mxu0 0.0
        %603 = vmatprep.subr.mxu0 0.0
        %604 = vmatpush1.msra.mxu0 0.0
        %605 = vmatprep.subr.mxu0 0.0
        %606 = vmatpush1.msra.mxu0 0.0
        %607 = vmatprep.subr.mxu0 0.0
        %608 = vmatpush1.msra.mxu0 0.0
        %609 = vmatprep.subr.mxu0 0.0
        %610 = vmatpush1.msra.mxu0 0.0
        %611 = vmatprep.subr.mxu0 0.0
        %612 = vmatpush1.msra.mxu0 0.0
        %613 = vmatprep.subr.mxu0 0.0
        %614 = vmatpush1.msra.mxu0 0.0
        %615 = vmatprep.subr.mxu0 0.0
        %616 = vmatpush1.msra.mxu0 0.0
        %617 = vmatprep.subr.mxu0 0.0
        %618 = vmatpush1.msra.mxu0 0.0
        %619 = vmatprep.subr.mxu0 0.0
        %620 = vmatpush1.msra.mxu0 0.0
        %621 = vmatprep.subr.mxu0 0.0
        %622 = vmatpush1.msra.mxu0 0.0
        %623 = vmatprep.mubr.f32.mxu0 0.0
        %624 = vmatmul.mubr.f32.gmra.mrb[0].mxu0 %v557
        %v625 = vpop.f32.mrb[0].mxu0
        %v626 = vadd.f32 0.0, %v625
        %v627 = vpop.f32.mrb[0].mxu0
        %628 = vdwg.mxu0
        %v630 = vsel %vm555, %v552, 0
        %632 = vmatprep.subr.mxu0 0.0
        %633 = vmatpush1.msra.mxu0 %v547
        %634 = vmatprep.subr.mxu0 0.0
        %635 = vmatpush1.msra.mxu0 0.0
        %636 = vmatprep.subr.mxu0 0.0
        %637 = vmatpush1.msra.mxu0 0.0
        %638 = vmatprep.subr.mxu0 0.0
        %639 = vmatpush1.msra.mxu0 0.0
        %640 = vmatprep.subr.mxu0 0.0
        %641 = vmatpush1.msra.mxu0 0.0
        %642 = vmatprep.subr.mxu0 0.0
        %643 = vmatpush1.msra.mxu0 0.0
        %644 = vmatprep.subr.mxu0 0.0
        %645 = vmatpush1.msra.mxu0 0.0
        %646 = vmatprep.subr.mxu0 0.0
        %647 = vmatpush1.msra.mxu0 0.0
        %648 = vmatprep.subr.mxu0 0.0
        %649 = vmatpush1.msra.mxu0 0.0
        %650 = vmatprep.subr.mxu0 0.0
        %651 = vmatpush1.msra.mxu0 0.0
        %652 = vmatprep.subr.mxu0 0.0
        %653 = vmatpush1.msra.mxu0 0.0
        %654 = vmatprep.subr.mxu0 0.0
        %655 = vmatpush1.msra.mxu0 0.0
        %656 = vmatprep.subr.mxu0 0.0
        %657 = vmatpush1.msra.mxu0 0.0
        %658 = vmatprep.subr.mxu0 0.0
        %659 = vmatpush1.msra.mxu0 0.0
        %660 = vmatprep.subr.mxu0 0.0
        %661 = vmatpush1.msra.mxu0 0.0
        %662 = vmatprep.subr.mxu0 0.0
        %663 = vmatpush1.msra.mxu0 0.0
        %664 = vmatprep.subr.mxu0 0.0
        %665 = vmatpush1.msra.mxu0 0.0
        %666 = vmatprep.subr.mxu0 0.0
        %667 = vmatpush1.msra.mxu0 0.0
        %668 = vmatprep.subr.mxu0 0.0
        %669 = vmatpush1.msra.mxu0 0.0
        %670 = vmatprep.subr.mxu0 0.0
        %671 = vmatpush1.msra.mxu0 0.0
        %672 = vmatprep.subr.mxu0 0.0
        %673 = vmatpush1.msra.mxu0 0.0
        %674 = vmatprep.subr.mxu0 0.0
        %675 = vmatpush1.msra.mxu0 0.0
        %676 = vmatprep.subr.mxu0 0.0
        %677 = vmatpush1.msra.mxu0 0.0
        %678 = vmatprep.subr.mxu0 0.0
        %679 = vmatpush1.msra.mxu0 0.0
        %680 = vmatprep.subr.mxu0 0.0
        %681 = vmatpush1.msra.mxu0 0.0
        %682 = vmatprep.subr.mxu0 0.0
        %683 = vmatpush1.msra.mxu0 0.0
        %684 = vmatprep.subr.mxu0 0.0
        %685 = vmatpush1.msra.mxu0 0.0
        %686 = vmatprep.subr.mxu0 0.0
        %687 = vmatpush1.msra.mxu0 0.0
        %688 = vmatprep.subr.mxu0 0.0
        %689 = vmatpush1.msra.mxu0 0.0
        %690 = vmatprep.subr.mxu0 0.0
        %691 = vmatpush1.msra.mxu0 0.0
        %692 = vmatprep.subr.mxu0 0.0
        %693 = vmatpush1.msra.mxu0 0.0
        %694 = vmatprep.subr.mxu0 0.0
        %695 = vmatpush1.msra.mxu0 0.0
        %696 = vmatprep.mubr.f32.mxu0 0.0
        %697 = vmatmul.mubr.f32.gmra.mrb[0].mxu0 %v630
        %v698 = vpop.f32.mrb[0].mxu0
        %v699 = vadd.f32 %v626, %v698
        %v700 = vpop.f32.mrb[0].mxu0
        %701 = vdwg.mxu0
        %s702 = scalar_lea.vmem %s3, 8
        %v703 = vld [vmem:[%s702] sm:$0xf]
        %v705 = vsel %vm555, %v703, 0
        %707 = vmatprep.subr.mxu0 0.0
        %708 = vmatpush1.msra.mxu0 %v550
        %709 = vmatprep.subr.mxu0 0.0
        %710 = vmatpush1.msra.mxu0 0.0
        %711 = vmatprep.subr.mxu0 0.0
        %712 = vmatpush1.msra.mxu0 0.0
        %713 = vmatprep.subr.mxu0 0.0
        %714 = vmatpush1.msra.mxu0 0.0
        %715 = vmatprep.subr.mxu0 0.0
        %716 = vmatpush1.msra.mxu0 0.0
        %717 = vmatprep.subr.mxu0 0.0
        %718 = vmatpush1.msra.mxu0 0.0
        %719 = vmatprep.subr.mxu0 0.0
        %720 = vmatpush1.msra.mxu0 0.0
        %721 = vmatprep.subr.mxu0 0.0
        %722 = vmatpush1.msra.mxu0 0.0
        %723 = vmatprep.subr.mxu0 0.0
        %724 = vmatpush1.msra.mxu0 0.0
        %725 = vmatprep.subr.mxu0 0.0
        %726 = vmatpush1.msra.mxu0 0.0
        %727 = vmatprep.subr.mxu0 0.0
        %728 = vmatpush1.msra.mxu0 0.0
        %729 = vmatprep.subr.mxu0 0.0
        %730 = vmatpush1.msra.mxu0 0.0
        %731 = vmatprep.subr.mxu0 0.0
        %732 = vmatpush1.msra.mxu0 0.0
        %733 = vmatprep.subr.mxu0 0.0
        %734 = vmatpush1.msra.mxu0 0.0
        %735 = vmatprep.subr.mxu0 0.0
        %736 = vmatpush1.msra.mxu0 0.0
        %737 = vmatprep.subr.mxu0 0.0
        %738 = vmatpush1.msra.mxu0 0.0
        %739 = vmatprep.subr.mxu0 0.0
        %740 = vmatpush1.msra.mxu0 0.0
        %741 = vmatprep.subr.mxu0 0.0
        %742 = vmatpush1.msra.mxu0 0.0
        %743 = vmatprep.subr.mxu0 0.0
        %744 = vmatpush1.msra.mxu0 0.0
        %745 = vmatprep.subr.mxu0 0.0
        %746 = vmatpush1.msra.mxu0 0.0
        %747 = vmatprep.subr.mxu0 0.0
        %748 = vmatpush1.msra.mxu0 0.0
        %749 = vmatprep.subr.mxu0 0.0
        %750 = vmatpush1.msra.mxu0 0.0
        %751 = vmatprep.subr.mxu0 0.0
        %752 = vmatpush1.msra.mxu0 0.0
        %753 = vmatprep.subr.mxu0 0.0
        %754 = vmatpush1.msra.mxu0 0.0
        %755 = vmatprep.subr.mxu0 0.0
        %756 = vmatpush1.msra.mxu0 0.0
        %757 = vmatprep.subr.mxu0 0.0
        %758 = vmatpush1.msra.mxu0 0.0
        %759 = vmatprep.subr.mxu0 0.0
        %760 = vmatpush1.msra.mxu0 0.0
        %761 = vmatprep.subr.mxu0 0.0
        %762 = vmatpush1.msra.mxu0 0.0
        %763 = vmatprep.subr.mxu0 0.0
        %764 = vmatpush1.msra.mxu0 0.0
        %765 = vmatprep.subr.mxu0 0.0
        %766 = vmatpush1.msra.mxu0 0.0
        %767 = vmatprep.subr.mxu0 0.0
        %768 = vmatpush1.msra.mxu0 0.0
        %769 = vmatprep.subr.mxu0 0.0
        %770 = vmatpush1.msra.mxu0 0.0
        %771 = vmatprep.mubr.f32.mxu0 0.0
        %772 = vmatmul.mubr.f32.gmra.mrb[0].mxu0 %v705
        %v773 = vpop.f32.mrb[0].mxu0
        %v774 = vadd.f32 0.0, %v773
        %v775 = vpop.f32.mrb[0].mxu0
        %776 = vdwg.mxu0
        %v777 = vadd.f32 %v699, %v774
        %779 = vset.pattern.permute.xlu0 0
        %780 = vperm.xlu0 %779, %v551
        %v781 = vpop.permute.xlu0 %780
        %v783 = vadd.f32 %v777, %v781
        %v784 = vmax.f32 %v783, 0.0
        %v785 = vadd.f32 %v784, %v274
        %v786 = vsel %vm309, %v785, 0.0
        %v787 = vrot.slane %v786, 4
        %v788 = vadd.f32 %v786, %v787
        %v789 = vrot.slane %v788, 2
        %v790 = vadd.f32 %v788, %v789
        %v791 = vrot.slane %v790, 1
        %v792 = vadd.f32 %v790, %v791
        %v793 = vrcp.pop 4.0
        %v794 = vmul.f32 %v792, %v793
        %v795 = vsub.f32 %v785, %v794
        %v796 = vmul.f32 %v795, %v795
        %v797 = vsel %vm309, %v796, 0.0
        %v798 = vrot.slane %v797, 4
        %v799 = vadd.f32 %v797, %v798
        %v800 = vrot.slane %v799, 2
        %v801 = vadd.f32 %v799, %v800
        %v802 = vrot.slane %v801, 1
        %v803 = vadd.f32 %v801, %v802
        %v804 = vmul.f32 %v803, %v793
        %v805 = vadd.f32 %v804, 1e-05
        %v806 = vrsqrt.pop %v805
        %v807 = vmul.f32 %v795, %v806
        %v808 = vld [vmem:[%s5] sm:$0xf]
        %810 = vset.pattern.permute.xlu0 0
        %811 = vperm.xlu0 %810, %v808
        %v812 = vpop.permute.xlu0 %811
        %v814 = vmul.f32 %v807, %v812
        %v815 = vld [vmem:[%s6] sm:$0xf]
        %817 = vset.pattern.permute.xlu0 0
        %818 = vperm.xlu0 %817, %v815
        %v819 = vpop.permute.xlu0 %818
        %v821 = vadd.f32 %v814, %v819
        %822 = vst [vmem:[%s269] sm:$0xf] %v821
        %s823 = sand.u32 %s181, 1
        %s824 = scalar_lea.sflag [#allocation3], %s823
        %s825 = sand.u32 %s181, 1
        %s826 = smul.addr %s825, 4
        %s827 = scalar_lea.vmem [#allocation2], %s826
        // Predicated region
        $region49: #{tpu_custom_call.1} parent=47 // pred_check
          %p828 = pneg %p191
        $region50: #{tpu_custom_call.1} parent=47 // pred_check_branch
          %830 = sbr.rel (%p828) target = $region52
        $region51: #{tpu_custom_call.1} parent=47 // pred_region
          %s832 = ssub.s32 64, 64
          %833 = vsyncadd %s824, %s832
          %s834 = smul.addr %s21, 64
          %s835 = scalar_lea.hbm %s7, %s834
          %s837 = sshll.u32 %s827, 4
          %s838 = int_to_ptr.vmem [resolvable:$true] %s837
          %840 = dma.vmem_to_hbm [thread:$0]  %s838, 64, %s835, %s824
        $region52: #{tpu_custom_call.1} parent=47 // pred_fallthru
          _
      $region48: #{tpu_custom_call.1} parent=5 // pred_fallthru
        _
      %p841 = scmp.le.s32.totalorder 2, %s16
      // Predicated region
      $region53: #{tpu_custom_call.1} parent=5 // pred_check
        %p842 = pneg %p841
      $region54: #{tpu_custom_call.1} parent=5 // pred_check_branch
        %844 = sbr.rel (%p842) target = $region56
      $region55: #{tpu_custom_call.1} parent=5 // pred_region
        %s845 = ssub.s32 %s16, 2
        // Predicated region
        $region57: #{tpu_custom_call.1} parent=55 // pred_check
          %p846 = pneg %p197
        $region58: #{tpu_custom_call.1} parent=55 // pred_check_branch
          %848 = sbr.rel (%p846) target = $region60
        $region59: #{tpu_custom_call.1} parent=55 // pred_region
          %s849 = sand.u32 %s182, 1
          %s850 = scalar_lea.sflag [#allocation3], %s849
          %s851 = sand.u32 %s182, 1
          %s852 = smul.addr %s851, 4
          %s853 = scalar_lea.vmem [#allocation2], %s852
          %854 = dma.done %s850, 64
        $region60: #{tpu_custom_call.1} parent=55 // pred_fallthru
          _
      $region56: #{tpu_custom_call.1} parent=5 // pred_fallthru
        _
    $region6: #{tpu_custom_call.1} parent=1 // loop_footer
      %s20 = sadd.s32 1, %s16
    $region7: #{tpu_custom_call.1} parent=1 // loop_footer_branch
      %15 = sbr.rel target = $region3
    $region8: #{tpu_custom_call.1} parent=1 // loop_exit
      _
    %855 = vsyncpa [#allocation3], 1
    %s856 = scalar_lea.sflag [#allocation3], 1
    %857 = vsyncpa %s856, 1

</llo_original>
